<compile_context>
chip_gen: v5e
topology: v5e:2x2
jax: 0.10.0
libtpu: 0.0.40
codegen_flags: <defaults>
</compile_context>

<pallas_src>
import jax
import jax.numpy as jnp
from jax.experimental import pallas as pl
from jax.experimental.pallas import tpu as pltpu


HIDDEN = 32
TILE_B = 512  # batch tile, mapped to lanes (multiple of 128)


def _softplus_torch(z):
    # PyTorch F.softplus with beta=1, threshold=20
    return jnp.where(z > 20.0, z, jnp.log1p(jnp.exp(jnp.minimum(z, 20.0))))


def regression_kernel(x_ref, w1_ref, b1_ref, w2_ref, b2_ref, wh_ref, bh_ref, out_ref):
    # x_ref: (1, TB)  w1/b1: (32, 1)  w2: (32, 32)  b2: (32, 1)  wh: (2, 32)  bh: (2, 1)
    x = x_ref[...]                                                    # (1, TB)

    # Layer 1 (in_features=1): rank-1 outer product on the VPU, not a degenerate MXU pass.
    h1 = jnp.maximum(w1_ref[...] * x + b1_ref[...], 0.0)             # (32, TB)

    # Layer 2 (32x32) on the MXU.
    h2 = jnp.dot(w2_ref[...], h1, preferred_element_type=jnp.float32) + b2_ref[...]
    h2 = jnp.maximum(h2, 0.0)                                         # (32, TB)

    # Fused mean/variance heads: (2, 32) @ (32, TB) -> (2, TB).
    z = jnp.dot(wh_ref[...], h2, preferred_element_type=jnp.float32) + bh_ref[...]

    # Row 0 -> mean (identity), row 1 -> softplus(variance logit). Lane-dense store.
    row = jax.lax.broadcasted_iota(jnp.int32, z.shape, 0)
    out_ref[...] = jnp.where(row == 0, z, _softplus_torch(z))


def regression_forward(x, params):
    """x: (N, 1) float32.  Returns (mean, variance), each (N, 1) float32."""
    n = x.shape[0]
    n_pad = pl.cdiv(n, TILE_B) * TILE_B
    # Pad the batch and transpose so batch sits on the lane axis: (1, n_pad).
    x_t = jnp.pad(x, ((0, n_pad - n), (0, 0))).T                      # (1, n_pad)

    w1, b1 = params["w1"], params["b1"]   # (32, 1), (32, 1)
    w2, b2 = params["w2"], params["b2"]   # (32, 32), (32, 1)
    wh, bh = params["wh"], params["bh"]   # (2, 32),  (2, 1)   fused mean/var head

    def full(a):
        return pl.BlockSpec(a.shape, lambda i: (0, 0))

    out = pl.pallas_call(
        regression_kernel,
        out_shape=jax.ShapeDtypeStruct((2, n_pad), jnp.float32),
        grid_spec=pltpu.PrefetchScalarGridSpec(
            num_scalar_prefetch=0,
            grid=(n_pad // TILE_B,),
            in_specs=[
                pl.BlockSpec((1, TILE_B), lambda i: (0, i)),          # x tile (lane-dense)
                full(w1), full(b1),
                full(w2), full(b2),
                full(wh), full(bh),
            ],
            out_specs=pl.BlockSpec((2, TILE_B), lambda i: (0, i)),    # fused (mean, var) slab
        ),
        compiler_params=pltpu.CompilerParams(
            dimension_semantics=("parallel",)),
    )(x_t, w1, b1, w2, b2, wh, bh)

    mean = out[0, :n][:, None]
    var = out[1, :n][:, None]
    return mean, var


def init_params(key):
    """Deterministic init mirroring nn.Linear shapes, stored in kernel layout:
    weights (out_features, in_features) like PyTorch, biases as (out_features, 1),
    with the two 32->1 heads fused into a single (2, 32) weight / (2, 1) bias."""
    ks = jax.random.split(key, 8)

    def uni(k, shape, fan_in):
        bound = 1.0 / jnp.sqrt(float(fan_in))
        return jax.random.uniform(k, shape, jnp.float32, -bound, bound)

    wm = uni(ks[4], (1, HIDDEN), HIDDEN)
    wv = uni(ks[6], (1, HIDDEN), HIDDEN)
    bm = uni(ks[5], (1, 1), HIDDEN)
    bv = uni(ks[7], (1, 1), HIDDEN)
    return {
        "w1": uni(ks[0], (HIDDEN, 1), 1),
        "b1": uni(ks[1], (HIDDEN, 1), 1),
        "w2": uni(ks[2], (HIDDEN, HIDDEN), HIDDEN),
        "b2": uni(ks[3], (HIDDEN, 1), HIDDEN),
        "wh": jnp.concatenate([wm, wv], axis=0),   # (2, 32)
        "bh": jnp.concatenate([bm, bv], axis=0),   # (2, 1)
    }


def reference_forward(x, p):
    """Pure-JAX reference in standard (batch, features) layout."""
    h1 = jnp.maximum(x @ p["w1"].T + p["b1"].T, 0.0)      # (N, 32)
    h2 = jnp.maximum(h1 @ p["w2"].T + p["b2"].T, 0.0)     # (N, 32)
    z = h2 @ p["wh"].T + p["bh"].T                        # (N, 2)
    mean = z[:, 0:1]
    var = jax.nn.softplus(z[:, 1:2])
    return mean, var


if __name__ == "__main__":
    key = jax.random.PRNGKey(0)
    pkey, xkey = jax.random.split(key)
    params = init_params(pkey)

    N = 1024  # batch of scalar regression inputs -> grid of 2 parallel steps
    x = jax.random.normal(xkey, (N, 1), dtype=jnp.float32)

    mean, var = regression_forward(x, params)
    jax.block_until_ready((mean, var))

    ref_mean, ref_var = reference_forward(x, params)
    assert mean.shape == (N, 1) and var.shape == (N, 1)
    assert jnp.allclose(mean, ref_mean, atol=1e-4, rtol=1e-5)
    assert jnp.allclose(var, ref_var, atol=1e-4, rtol=1e-5)
    assert bool(jnp.all(var >= 0.0))

    print("KERNEL_OK")
</pallas_src>

<mosaic_0001>
module attributes {stable_mosaic.version = 11 : i64} {
  func.func @regression_kernel(%arg0: i32, %arg1: memref<1x512xf32, #tpu.memory_space<vmem>>, %arg2: memref<32x1xf32, #tpu.memory_space<vmem>>, %arg3: memref<32x1xf32, #tpu.memory_space<vmem>>, %arg4: memref<32x32xf32, #tpu.memory_space<vmem>>, %arg5: memref<32x1xf32, #tpu.memory_space<vmem>>, %arg6: memref<2x32xf32, #tpu.memory_space<vmem>>, %arg7: memref<2x1xf32, #tpu.memory_space<vmem>>, %arg8: memref<2x512xf32, #tpu.memory_space<vmem>>) attributes {dimension_semantics = [#tpu.dimension_semantics<parallel>], iteration_bounds = array<i64: 2>, scalar_prefetch = 0 : i64, scratch_operands = 0 : i64, tpu.core_type = #tpu.core_type<tc>, window_params = [{transform_indices = @transform_0, window_bounds = array<i64: 1, 512>}, {pipeline_mode = #tpu.pipeline_mode<synchronous>, transform_indices = @transform_1, window_bounds = array<i64: 32, 1>}, {pipeline_mode = #tpu.pipeline_mode<synchronous>, transform_indices = @transform_2, window_bounds = array<i64: 32, 1>}, {pipeline_mode = #tpu.pipeline_mode<synchronous>, transform_indices = @transform_3, window_bounds = array<i64: 32, 32>}, {pipeline_mode = #tpu.pipeline_mode<synchronous>, transform_indices = @transform_4, window_bounds = array<i64: 32, 1>}, {pipeline_mode = #tpu.pipeline_mode<synchronous>, transform_indices = @transform_5, window_bounds = array<i64: 2, 32>}, {pipeline_mode = #tpu.pipeline_mode<synchronous>, transform_indices = @transform_6, window_bounds = array<i64: 2, 1>}, {transform_indices = @transform_7, window_bounds = array<i64: 2, 512>}]} {
    %c0 = arith.constant 0 : index
    %c0_0 = arith.constant 0 : index
    %0 = vector.load %arg1[%c0, %c0_0] : memref<1x512xf32, #tpu.memory_space<vmem>>, vector<1x512xf32>
    %c0_1 = arith.constant 0 : index
    %c0_2 = arith.constant 0 : index
    %1 = vector.load %arg2[%c0_1, %c0_2] : memref<32x1xf32, #tpu.memory_space<vmem>>, vector<32x1xf32>
    %2 = vector.broadcast %1 : vector<32x1xf32> to vector<32x512xf32>
    %3 = vector.broadcast %0 : vector<1x512xf32> to vector<32x512xf32>
    %4 = arith.mulf %2, %3 : vector<32x512xf32>
    %c0_3 = arith.constant 0 : index
    %c0_4 = arith.constant 0 : index
    %5 = vector.load %arg3[%c0_3, %c0_4] : memref<32x1xf32, #tpu.memory_space<vmem>>, vector<32x1xf32>
    %6 = vector.broadcast %5 : vector<32x1xf32> to vector<32x512xf32>
    %7 = arith.addf %4, %6 : vector<32x512xf32>
    %cst = arith.constant 0.000000e+00 : f32
    %8 = vector.broadcast %cst : f32 to vector<32x512xf32>
    %9 = arith.maximumf %7, %8 : vector<32x512xf32>
    %c0_5 = arith.constant 0 : index
    %c0_6 = arith.constant 0 : index
    %10 = vector.load %arg4[%c0_5, %c0_6] : memref<32x32xf32, #tpu.memory_space<vmem>>, vector<32x32xf32>
    %cst_7 = arith.constant dense<0.000000e+00> : vector<32x512xf32>
    %11 = tpu.matmul %10, %9, %cst_7 {dimension_numbers = #tpu.dot_dimension_numbers<[1], [0], [0], [1], [0, 0, 1, 1], [], []>} : vector<32x32xf32>, vector<32x512xf32>, vector<32x512xf32> -> vector<32x512xf32>
    %c0_8 = arith.constant 0 : index
    %c0_9 = arith.constant 0 : index
    %12 = vector.load %arg5[%c0_8, %c0_9] : memref<32x1xf32, #tpu.memory_space<vmem>>, vector<32x1xf32>
    %13 = vector.broadcast %12 : vector<32x1xf32> to vector<32x512xf32>
    %14 = arith.addf %11, %13 : vector<32x512xf32>
    %cst_10 = arith.constant 0.000000e+00 : f32
    %15 = vector.broadcast %cst_10 : f32 to vector<32x512xf32>
    %16 = arith.maximumf %14, %15 : vector<32x512xf32>
    %c0_11 = arith.constant 0 : index
    %c0_12 = arith.constant 0 : index
    %17 = vector.load %arg6[%c0_11, %c0_12] : memref<2x32xf32, #tpu.memory_space<vmem>>, vector<2x32xf32>
    %cst_13 = arith.constant dense<0.000000e+00> : vector<2x512xf32>
    %18 = tpu.matmul %17, %16, %cst_13 {dimension_numbers = #tpu.dot_dimension_numbers<[1], [0], [0], [1], [0, 0, 1, 1], [], []>} : vector<2x32xf32>, vector<32x512xf32>, vector<2x512xf32> -> vector<2x512xf32>
    %c0_14 = arith.constant 0 : index
    %c0_15 = arith.constant 0 : index
    %19 = vector.load %arg7[%c0_14, %c0_15] : memref<2x1xf32, #tpu.memory_space<vmem>>, vector<2x1xf32>
    %20 = vector.broadcast %19 : vector<2x1xf32> to vector<2x512xf32>
    %21 = arith.addf %18, %20 : vector<2x512xf32>
    %22 = tpu.iota {dimensions = array<i32: 0>} : vector<2x512xi32>
    %c0_i32 = arith.constant 0 : i32
    %23 = vector.broadcast %c0_i32 : i32 to vector<2x512xi32>
    %24 = arith.cmpi eq, %22, %23 : vector<2x512xi32>
    %cst_16 = arith.constant 2.000000e+01 : f32
    %25 = vector.broadcast %cst_16 : f32 to vector<2x512xf32>
    %26 = arith.cmpf ogt, %21, %25 : vector<2x512xf32>
    %cst_17 = arith.constant 2.000000e+01 : f32
    %27 = vector.broadcast %cst_17 : f32 to vector<2x512xf32>
    %28 = arith.minimumf %21, %27 : vector<2x512xf32>
    %29 = math.exp %28 : vector<2x512xf32>
    %30 = math.log1p %29 : vector<2x512xf32>
    %31 = arith.select %26, %21, %30 : vector<2x512xi1>, vector<2x512xf32>
    %32 = arith.select %24, %21, %31 : vector<2x512xi1>, vector<2x512xf32>
    %c0_18 = arith.constant 0 : index
    %c0_19 = arith.constant 0 : index
    %33 = vector.load %arg8[%c0_18, %c0_19] : memref<2x512xf32, #tpu.memory_space<vmem>>, vector<2x512xf32>
    tpu.vector_store %arg8[%c0_18, %c0_19], %32 {strides = array<i32>} : memref<2x512xf32, #tpu.memory_space<vmem>>, vector<2x512xf32>,
    return
  }
  func.func @transform_0(%arg0: i32) -> (i32, i32) {
    %c0_i32 = arith.constant 0 : i32
    %c0_i32_0 = arith.constant 0 : i32
    return %c0_i32, %arg0 : i32, i32
  }
  func.func @transform_1(%arg0: i32) -> (i32, i32) {
    %c0_i32 = arith.constant 0 : i32
    %c0_i32_0 = arith.constant 0 : i32
    %c0_i32_1 = arith.constant 0 : i32
    return %c0_i32, %c0_i32_0 : i32, i32
  }
  func.func @transform_2(%arg0: i32) -> (i32, i32) {
    %c0_i32 = arith.constant 0 : i32
    %c0_i32_0 = arith.constant 0 : i32
    %c0_i32_1 = arith.constant 0 : i32
    return %c0_i32, %c0_i32_0 : i32, i32
  }
  func.func @transform_3(%arg0: i32) -> (i32, i32) {
    %c0_i32 = arith.constant 0 : i32
    %c0_i32_0 = arith.constant 0 : i32
    %c0_i32_1 = arith.constant 0 : i32
    return %c0_i32, %c0_i32_0 : i32, i32
  }
  func.func @transform_4(%arg0: i32) -> (i32, i32) {
    %c0_i32 = arith.constant 0 : i32
    %c0_i32_0 = arith.constant 0 : i32
    %c0_i32_1 = arith.constant 0 : i32
    return %c0_i32, %c0_i32_0 : i32, i32
  }
  func.func @transform_5(%arg0: i32) -> (i32, i32) {
    %c0_i32 = arith.constant 0 : i32
    %c0_i32_0 = arith.constant 0 : i32
    %c0_i32_1 = arith.constant 0 : i32
    return %c0_i32, %c0_i32_0 : i32, i32
  }
  func.func @transform_6(%arg0: i32) -> (i32, i32) {
    %c0_i32 = arith.constant 0 : i32
    %c0_i32_0 = arith.constant 0 : i32
    %c0_i32_1 = arith.constant 0 : i32
    return %c0_i32, %c0_i32_0 : i32, i32
  }
  func.func @transform_7(%arg0: i32) -> (i32, i32) {
    %c0_i32 = arith.constant 0 : i32
    %c0_i32_0 = arith.constant 0 : i32
    return %c0_i32, %arg0 : i32, i32
  }
}

</mosaic_0001>

<llo_original>
// kernel: tpu_custom_call.1
$region0: #{tpu_custom_call.1}
  #allocation0 [shape = 'u32[]', space=smem, size = 0x4, offset = 0x4, fixed_abs, tag = 'smem constant byte address 0x4 - core index']
  #allocation1 [shape = 'u32[72,128]{1,0:T(1,128)}', space=vmem, size = 0x9000, scoped, tag = 'internal scratch']
  %s0 = inlined_call_operand.vmem [shape: f32[1,1024], index: 0, kind: input, shape index: {}]
  %s1 = inlined_call_operand.vmem [shape: f32[32,1], index: 1, kind: input, shape index: {}]
  %s2 = inlined_call_operand.vmem [shape: f32[32,1], index: 2, kind: input, shape index: {}]
  %s3 = inlined_call_operand.vmem [shape: f32[32,32], index: 3, kind: input, shape index: {}]
  %s4 = inlined_call_operand.vmem [shape: f32[32,1], index: 4, kind: input, shape index: {}]
  %s5 = inlined_call_operand.vmem [shape: f32[2,32], index: 5, kind: input, shape index: {}]
  %s6 = inlined_call_operand.vmem [shape: f32[2,1], index: 6, kind: input, shape index: {}]
  %s7 = inlined_call_operand.hbm [shape: f32[2,1024], index: 7, kind: output, shape index: {}]
  %s8 = sld [smem:[#allocation0]]
  $region61: #{tpu_custom_call.1} parent=0
    _
  %s10 = ssub.s32 1, %s8
  %s11 = scalar_select 0, %s10, %s8
  $region1: #{tpu_custom_call.1} parent=0
    #allocation2 [shape = 'u8[8192]{0}', space=vmem, size = 0x2000, scoped, tag = 'output window, operand 0']
    #allocation3 [shape = 's32[2]{0}', space=sflag, size = 0x8, scoped, tag = 'scoped memory for tpu_custom_call.1']
    %12 = vsyncpa [#allocation3], 0
    %s13 = scalar_lea.sflag [#allocation3], 1
    %14 = vsyncpa %s13, 0
    loop: start=0, step=1, limit=4
    $region2: #{tpu_custom_call.1} parent=1 // loop_pre_header
      _
    $region3: #{tpu_custom_call.1} parent=1 // loop_header
      %s16 = sphi 0, %s20
      %p17 = scmp.ge.s32.totalorder %s16, 4
      %s26 = sphi 0, %s28
      %s29 = sphi 0, %s26
      %s30 = sphi 0, %s29
      %s46 = sphi 0, %s30
      %s50 = sphi 0, %s50
      %s52 = sphi 0, %s50
      %s53 = sphi 0, %s52
      %s67 = sphi 0, %s53
      %s71 = sphi 0, %s71
      %s73 = sphi 0, %s71
      %s74 = sphi 0, %s73
      %s88 = sphi 0, %s74
      %s92 = sphi 0, %s92
      %s94 = sphi 0, %s92
      %s95 = sphi 0, %s94
      %s109 = sphi 0, %s95
      %s113 = sphi 0, %s113
      %s115 = sphi 0, %s113
      %s116 = sphi 0, %s115
      %s130 = sphi 0, %s116
      %s134 = sphi 0, %s134
      %s136 = sphi 0, %s134
      %s137 = sphi 0, %s136
      %s151 = sphi 0, %s137
      %s155 = sphi 0, %s155
      %s157 = sphi 0, %s155
      %s158 = sphi 0, %s157
      %s172 = sphi 0, %s158
      %s178 = sphi 0, %s180
      %s181 = sphi 0, %s178
      %s182 = sphi 0, %s181
      %s198 = sphi 0, %s182
    $region4: #{tpu_custom_call.1} parent=1 // loop_header_branch
      %19 = sbr.rel (%p17) target = $region8
    $region5: #{tpu_custom_call.1} parent=1 // loop_body
      %s21 = ssub.s32 %s16, 1
      %s22 = ssub.s32 %s16, 2
      %s23 = sadd.s32 %s16, 1
      %s24 = ssub.s32 %s16, %s23
      %p25 = scmp.eq.s32.totalorder %s24, 0
      %s27 = sadd.s32 %s26, 1
      %s28 = scalar_select %p25, %s26, %s27
      %p31 = pneg %p25
      %p32 = scmp.eq.s32.totalorder %s16, 1
      %p33 = por %p31, %p32
      %p34 = scmp.ne.s32.totalorder %s26, %s29
      %p35 = scmp.eq.s32.totalorder %s16, 0
      %p36 = por %p34, %p35
      %p37 = scmp.ne.s32.totalorder %s26, %s29
      %p38 = scmp.eq.s32.totalorder %s21, 1
      %p39 = por %p37, %p38
      %p40 = scmp.ne.s32.totalorder %s29, %s30
      %p41 = scmp.eq.s32.totalorder %s21, 0
      %p42 = por %p40, %p41
      %p43 = scmp.ne.s32.totalorder %s29, %s30
      %p44 = scmp.eq.s32.totalorder %s22, 1
      %p45 = por %p43, %p44
      %p47 = scmp.ne.s32.totalorder %s30, %s46
      %p48 = scmp.eq.s32.totalorder %s22, 0
      %p49 = por %p47, %p48
      %s51 = sadd.s32 %s50, 1
      %p54 = scmp.eq.s32.totalorder %s16, 1
      %p55 = scmp.ne.s32.totalorder %s50, %s52
      %p56 = scmp.eq.s32.totalorder %s16, 0
      %p57 = por %p55, %p56
      %p58 = scmp.ne.s32.totalorder %s50, %s52
      %p59 = scmp.eq.s32.totalorder %s21, 1
      %p60 = por %p58, %p59
      %p61 = scmp.ne.s32.totalorder %s52, %s53
      %p62 = scmp.eq.s32.totalorder %s21, 0
      %p63 = por %p61, %p62
      %p64 = scmp.ne.s32.totalorder %s52, %s53
      %p65 = scmp.eq.s32.totalorder %s22, 1
      %p66 = por %p64, %p65
      %p68 = scmp.ne.s32.totalorder %s53, %s67
      %p69 = scmp.eq.s32.totalorder %s22, 0
      %p70 = por %p68, %p69
      %s72 = sadd.s32 %s71, 1
      %p75 = scmp.eq.s32.totalorder %s16, 1
      %p76 = scmp.ne.s32.totalorder %s71, %s73
      %p77 = scmp.eq.s32.totalorder %s16, 0
      %p78 = por %p76, %p77
      %p79 = scmp.ne.s32.totalorder %s71, %s73
      %p80 = scmp.eq.s32.totalorder %s21, 1
      %p81 = por %p79, %p80
      %p82 = scmp.ne.s32.totalorder %s73, %s74
      %p83 = scmp.eq.s32.totalorder %s21, 0
      %p84 = por %p82, %p83
      %p85 = scmp.ne.s32.totalorder %s73, %s74
      %p86 = scmp.eq.s32.totalorder %s22, 1
      %p87 = por %p85, %p86
      %p89 = scmp.ne.s32.totalorder %s74, %s88
      %p90 = scmp.eq.s32.totalorder %s22, 0
      %p91 = por %p89, %p90
      %s93 = sadd.s32 %s92, 1
      %p96 = scmp.eq.s32.totalorder %s16, 1
      %p97 = scmp.ne.s32.totalorder %s92, %s94
      %p98 = scmp.eq.s32.totalorder %s16, 0
      %p99 = por %p97, %p98
      %p100 = scmp.ne.s32.totalorder %s92, %s94
      %p101 = scmp.eq.s32.totalorder %s21, 1
      %p102 = por %p100, %p101
      %p103 = scmp.ne.s32.totalorder %s94, %s95
      %p104 = scmp.eq.s32.totalorder %s21, 0
      %p105 = por %p103, %p104
      %p106 = scmp.ne.s32.totalorder %s94, %s95
      %p107 = scmp.eq.s32.totalorder %s22, 1
      %p108 = por %p106, %p107
      %p110 = scmp.ne.s32.totalorder %s95, %s109
      %p111 = scmp.eq.s32.totalorder %s22, 0
      %p112 = por %p110, %p111
      %s114 = sadd.s32 %s113, 1
      %p117 = scmp.eq.s32.totalorder %s16, 1
      %p118 = scmp.ne.s32.totalorder %s113, %s115
      %p119 = scmp.eq.s32.totalorder %s16, 0
      %p120 = por %p118, %p119
      %p121 = scmp.ne.s32.totalorder %s113, %s115
      %p122 = scmp.eq.s32.totalorder %s21, 1
      %p123 = por %p121, %p122
      %p124 = scmp.ne.s32.totalorder %s115, %s116
      %p125 = scmp.eq.s32.totalorder %s21, 0
      %p126 = por %p124, %p125
      %p127 = scmp.ne.s32.totalorder %s115, %s116
      %p128 = scmp.eq.s32.totalorder %s22, 1
      %p129 = por %p127, %p128
      %p131 = scmp.ne.s32.totalorder %s116, %s130
      %p132 = scmp.eq.s32.totalorder %s22, 0
      %p133 = por %p131, %p132
      %s135 = sadd.s32 %s134, 1
      %p138 = scmp.eq.s32.totalorder %s16, 1
      %p139 = scmp.ne.s32.totalorder %s134, %s136
      %p140 = scmp.eq.s32.totalorder %s16, 0
      %p141 = por %p139, %p140
      %p142 = scmp.ne.s32.totalorder %s134, %s136
      %p143 = scmp.eq.s32.totalorder %s21, 1
      %p144 = por %p142, %p143
      %p145 = scmp.ne.s32.totalorder %s136, %s137
      %p146 = scmp.eq.s32.totalorder %s21, 0
      %p147 = por %p145, %p146
      %p148 = scmp.ne.s32.totalorder %s136, %s137
      %p149 = scmp.eq.s32.totalorder %s22, 1
      %p150 = por %p148, %p149
      %p152 = scmp.ne.s32.totalorder %s137, %s151
      %p153 = scmp.eq.s32.totalorder %s22, 0
      %p154 = por %p152, %p153
      %s156 = sadd.s32 %s155, 1
      %p159 = scmp.eq.s32.totalorder %s16, 1
      %p160 = scmp.ne.s32.totalorder %s155, %s157
      %p161 = scmp.eq.s32.totalorder %s16, 0
      %p162 = por %p160, %p161
      %p163 = scmp.ne.s32.totalorder %s155, %s157
      %p164 = scmp.eq.s32.totalorder %s21, 1
      %p165 = por %p163, %p164
      %p166 = scmp.ne.s32.totalorder %s157, %s158
      %p167 = scmp.eq.s32.totalorder %s21, 0
      %p168 = por %p166, %p167
      %p169 = scmp.ne.s32.totalorder %s157, %s158
      %p170 = scmp.eq.s32.totalorder %s22, 1
      %p171 = por %p169, %p170
      %p173 = scmp.ne.s32.totalorder %s158, %s172
      %p174 = scmp.eq.s32.totalorder %s22, 0
      %p175 = por %p173, %p174
      %s176 = ssub.s32 %s16, %s23
      %p177 = scmp.eq.s32.totalorder %s176, 0
      %s179 = sadd.s32 %s178, 1
      %s180 = scalar_select %p177, %s178, %s179
      %p183 = pneg %p177
      %p184 = scmp.eq.s32.totalorder %s16, 1
      %p185 = por %p183, %p184
      %p186 = scmp.ne.s32.totalorder %s178, %s181
      %p187 = scmp.eq.s32.totalorder %s16, 0
      %p188 = por %p186, %p187
      %p189 = scmp.ne.s32.totalorder %s178, %s181
      %p190 = scmp.eq.s32.totalorder %s21, 1
      %p191 = por %p189, %p190
      %p192 = scmp.ne.s32.totalorder %s181, %s182
      %p193 = scmp.eq.s32.totalorder %s21, 0
      %p194 = por %p192, %p193
      %p195 = scmp.ne.s32.totalorder %s181, %s182
      %p196 = scmp.eq.s32.totalorder %s22, 1
      %p197 = por %p195, %p196
      %p199 = scmp.ne.s32.totalorder %s182, %s198
      %p200 = scmp.eq.s32.totalorder %s22, 0
      %p201 = por %p199, %p200
      %p202 = scmp.le.s32.totalorder 1, %s16
      %p203 = scmp.lt.s32.totalorder %s16, 3
      %p204 = pnand %p202, %p203
      %p205 = pneg %p204
      // Predicated region
      $region9: #{tpu_custom_call.1} parent=5 // pred_check
        _
      $region10: #{tpu_custom_call.1} parent=5 // pred_check_branch
        %207 = sbr.rel (%p204) target = $region12
      $region11: #{tpu_custom_call.1} parent=5 // pred_region
        %s208 = ssub.s32 %s16, 1
        // Predicated region
        $region13: #{tpu_custom_call.1} parent=11 // pred_check
          %p209 = pneg %p63
        $region14: #{tpu_custom_call.1} parent=11 // pred_check_branch
          %211 = sbr.rel (%p209) target = $region16
        $region15: #{tpu_custom_call.1} parent=11 // pred_region
          _
        $region16: #{tpu_custom_call.1} parent=11 // pred_fallthru
          _
        // Predicated region
        $region17: #{tpu_custom_call.1} parent=11 // pred_check
          %p212 = pneg %p84
        $region18: #{tpu_custom_call.1} parent=11 // pred_check_branch
          %214 = sbr.rel (%p212) target = $region20
        $region19: #{tpu_custom_call.1} parent=11 // pred_region
          _
        $region20: #{tpu_custom_call.1} parent=11 // pred_fallthru
          _
        // Predicated region
        $region21: #{tpu_custom_call.1} parent=11 // pred_check
          %p215 = pneg %p105
        $region22: #{tpu_custom_call.1} parent=11 // pred_check_branch
          %217 = sbr.rel (%p215) target = $region24
        $region23: #{tpu_custom_call.1} parent=11 // pred_region
          _
        $region24: #{tpu_custom_call.1} parent=11 // pred_fallthru
          _
        // Predicated region
        $region25: #{tpu_custom_call.1} parent=11 // pred_check
          %p218 = pneg %p126
        $region26: #{tpu_custom_call.1} parent=11 // pred_check_branch
          %220 = sbr.rel (%p218) target = $region28
        $region27: #{tpu_custom_call.1} parent=11 // pred_region
          _
        $region28: #{tpu_custom_call.1} parent=11 // pred_fallthru
          _
        // Predicated region
        $region29: #{tpu_custom_call.1} parent=11 // pred_check
          %p221 = pneg %p147
        $region30: #{tpu_custom_call.1} parent=11 // pred_check_branch
          %223 = sbr.rel (%p221) target = $region32
        $region31: #{tpu_custom_call.1} parent=11 // pred_region
          _
        $region32: #{tpu_custom_call.1} parent=11 // pred_fallthru
          _
        // Predicated region
        $region33: #{tpu_custom_call.1} parent=11 // pred_check
          %p224 = pneg %p168
        $region34: #{tpu_custom_call.1} parent=11 // pred_check_branch
          %226 = sbr.rel (%p224) target = $region36
        $region35: #{tpu_custom_call.1} parent=11 // pred_region
          _
        $region36: #{tpu_custom_call.1} parent=11 // pred_fallthru
          _
      $region12: #{tpu_custom_call.1} parent=5 // pred_fallthru
        _
      %p227 = scmp.lt.s32.totalorder %s16, 2
      // Predicated region
      $region37: #{tpu_custom_call.1} parent=5 // pred_check
        %p228 = pneg %p227
      $region38: #{tpu_custom_call.1} parent=5 // pred_check_branch
        %230 = sbr.rel (%p228) target = $region40
      $region39: #{tpu_custom_call.1} parent=5 // pred_region
        // Predicated region
        $region41: #{tpu_custom_call.1} parent=39 // pred_check
          %p231 = pneg %p36
        $region42: #{tpu_custom_call.1} parent=39 // pred_check_branch
          %233 = sbr.rel (%p231) target = $region44
        $region43: #{tpu_custom_call.1} parent=39 // pred_region
          %s234 = smul.u32 4, %s16
          %p235 = scmp.lt.s32.totalorder %s234, 7
          %s236 = scalar_select %p235, %s234, 7
          %s237 = scalar_lea.vmem %s0, %s236
          %s238 = smul.u32 4, %s16
        $region44: #{tpu_custom_call.1} parent=39 // pred_fallthru
          _
      $region40: #{tpu_custom_call.1} parent=5 // pred_fallthru
        _
      %p239 = scmp.le.s32.totalorder 1, %s16
      %p240 = scmp.lt.s32.totalorder %s16, 3
      %p241 = pnand %p239, %p240
      %p242 = pneg %p241
      // Predicated region
      $region45: #{tpu_custom_call.1} parent=5 // pred_check
        _
      $region46: #{tpu_custom_call.1} parent=5 // pred_check_branch
        %244 = sbr.rel (%p241) target = $region48
      $region47: #{tpu_custom_call.1} parent=5 // pred_region
        %s245 = ssub.s32 %s16, 1
        %s246 = smul.u32 4, %s21
        %p247 = scmp.lt.s32.totalorder %s246, 7
        %s248 = scalar_select %p247, %s246, 7
        %s249 = scalar_lea.vmem %s0, %s248
        %p250 = pneg %p42
        %p251 = pneg %p39
        %p252 = pneg %p63
        %p253 = pneg %p60
        %p254 = pneg %p84
        %p255 = pneg %p81
        %p256 = pneg %p105
        %p257 = pneg %p102
        %p258 = pneg %p126
        %p259 = pneg %p123
        %p260 = pneg %p147
        %p261 = pneg %p144
        %p262 = pneg %p168
        %p263 = pneg %p165
        %p264 = pneg %p194
        %p265 = pneg %p191
        %s266 = sand.u32 %s181, 1
        %s267 = scalar_lea.sflag [#allocation3], %s266
        %s268 = sand.u32 %s181, 1
        %s269 = smul.addr %s268, 8
        %s270 = scalar_lea.vmem [#allocation2], %s269
        %s271 = smul.u32 4, %s21
        %p272 = scmp.lt.s32.totalorder %s271, 7
        %s273 = scalar_select %p272, %s271, 7
        %s274 = scalar_lea.vmem %s0, %s273
        %s275 = smul.u32 4, %s21
        %s276 = smul.u32 4, %s21
        %v277 = vld [vmem:[%s274] sm:$0xf]
        %v278 = vld [vmem:[%s1] sm:$0xff]
        %v279 = vld [vmem:[%s1 + $0x8] sm:$0xff]
        %v280 = vld [vmem:[%s1 + $0x10] sm:$0xff]
        %v281 = vld [vmem:[%s1 + $0x18] sm:$0xff]
        %283 = vset.pattern.permute.xlu0 0
        %284 = vperm.xlu0 %283, %v278
        %v285 = vpop.permute.xlu0 %284
        %288 = vset.pattern.permute.xlu0 0
        %289 = vperm.xlu0 %288, %v279
        %v290 = vpop.permute.xlu0 %289
        %293 = vset.pattern.permute.xlu0 0
        %294 = vperm.xlu0 %293, %v280
        %v295 = vpop.permute.xlu0 %294
        %298 = vset.pattern.permute.xlu0 0
        %299 = vperm.xlu0 %298, %v281
        %v300 = vpop.permute.xlu0 %299
        %v303 = vperm.slane %v277, 0
        %v304 = vperm.slane %v277, 1
        %v305 = vperm.slane %v277, 2
        %v306 = vperm.slane %v277, 3
        %v311 = vmul.f32 %v285, %v303
        %v312 = vmul.f32 %v285, %v304
        %v313 = vmul.f32 %v285, %v305
        %v314 = vmul.f32 %v285, %v306
        %v315 = vmul.f32 %v290, %v303
        %v316 = vmul.f32 %v290, %v304
        %v317 = vmul.f32 %v290, %v305
        %v318 = vmul.f32 %v290, %v306
        %v319 = vmul.f32 %v295, %v303
        %v320 = vmul.f32 %v295, %v304
        %v321 = vmul.f32 %v295, %v305
        %v322 = vmul.f32 %v295, %v306
        %v323 = vmul.f32 %v300, %v303
        %v324 = vmul.f32 %v300, %v304
        %v325 = vmul.f32 %v300, %v305
        %v326 = vmul.f32 %v300, %v306
        %v327 = vld [vmem:[%s2] sm:$0xff]
        %v328 = vld [vmem:[%s2 + $0x8] sm:$0xff]
        %v329 = vld [vmem:[%s2 + $0x10] sm:$0xff]
        %v330 = vld [vmem:[%s2 + $0x18] sm:$0xff]
        %332 = vset.pattern.permute.xlu0 0
        %333 = vperm.xlu0 %332, %v327
        %v334 = vpop.permute.xlu0 %333
        %337 = vset.pattern.permute.xlu0 0
        %338 = vperm.xlu0 %337, %v328
        %v339 = vpop.permute.xlu0 %338
        %342 = vset.pattern.permute.xlu0 0
        %343 = vperm.xlu0 %342, %v329
        %v344 = vpop.permute.xlu0 %343
        %347 = vset.pattern.permute.xlu0 0
        %348 = vperm.xlu0 %347, %v330
        %v349 = vpop.permute.xlu0 %348
        %v351 = vadd.f32 %v311, %v334
        %v352 = vadd.f32 %v312, %v334
        %v353 = vadd.f32 %v313, %v334
        %v354 = vadd.f32 %v314, %v334
        %v355 = vadd.f32 %v315, %v339
        %v356 = vadd.f32 %v316, %v339
        %v357 = vadd.f32 %v317, %v339
        %v358 = vadd.f32 %v318, %v339
        %v359 = vadd.f32 %v319, %v344
        %v360 = vadd.f32 %v320, %v344
        %v361 = vadd.f32 %v321, %v344
        %v362 = vadd.f32 %v322, %v344
        %v363 = vadd.f32 %v323, %v349
        %v364 = vadd.f32 %v324, %v349
        %v365 = vadd.f32 %v325, %v349
        %v366 = vadd.f32 %v326, %v349
        %v367 = vmax.f32 %v351, 0.0
        %v368 = vmax.f32 %v352, 0.0
        %v369 = vmax.f32 %v353, 0.0
        %v370 = vmax.f32 %v354, 0.0
        %v371 = vmax.f32 %v355, 0.0
        %v372 = vmax.f32 %v356, 0.0
        %v373 = vmax.f32 %v357, 0.0
        %v374 = vmax.f32 %v358, 0.0
        %v375 = vmax.f32 %v359, 0.0
        %v376 = vmax.f32 %v360, 0.0
        %v377 = vmax.f32 %v361, 0.0
        %v378 = vmax.f32 %v362, 0.0
        %v379 = vmax.f32 %v363, 0.0
        %v380 = vmax.f32 %v364, 0.0
        %v381 = vmax.f32 %v365, 0.0
        %v382 = vmax.f32 %v366, 0.0
        %v383 = vld [vmem:[%s3] sm:$0xff]
        %v384 = vld [vmem:[%s3 + $0x8] sm:$0xff]
        %v385 = vld [vmem:[%s3 + $0x10] sm:$0xff]
        %v386 = vld [vmem:[%s3 + $0x18] sm:$0xff]
        %v387 = vld [vmem:[%s4] sm:$0xff]
        %v388 = vld [vmem:[%s4 + $0x8] sm:$0xff]
        %v389 = vld [vmem:[%s4 + $0x10] sm:$0xff]
        %v390 = vld [vmem:[%s4 + $0x18] sm:$0xff]
        %392 = vset.pattern.permute.xlu0 0
        %393 = vperm.xlu0 %392, %v387
        %v394 = vpop.permute.xlu0 %393
        %397 = vset.pattern.permute.xlu0 0
        %398 = vperm.xlu0 %397, %v388
        %v399 = vpop.permute.xlu0 %398
        %402 = vset.pattern.permute.xlu0 0
        %403 = vperm.xlu0 %402, %v389
        %v404 = vpop.permute.xlu0 %403
        %407 = vset.pattern.permute.xlu0 0
        %408 = vperm.xlu0 %407, %v390
        %v409 = vpop.permute.xlu0 %408
        %vm411 = vcmask 261120
        %v413 = vsel %vm411, %v383, 0
        %v416 = vsel %vm411, %v384, 0
        %v419 = vsel %vm411, %v385, 0
        %v422 = vsel %vm411, %v386, 0
        %424 = vmatpush.msra.mxu0 0.0
        %425 = vmatpush.msra.mxu0 0.0
        %426 = vmatpush.msra.mxu0 0.0
        %427 = vmatpush.msra.mxu0 0.0
        %428 = vmatpush.msra.mxu0 0.0
        %429 = vmatpush.msra.mxu0 0.0
        %430 = vmatpush.msra.mxu0 0.0
        %431 = vmatpush.msra.mxu0 0.0
        %432 = vmatpush.msra.mxu0 0.0
        %433 = vmatpush.msra.mxu0 0.0
        %434 = vmatpush.msra.mxu0 0.0
        %435 = vmatpush.msra.mxu0 0.0
        %436 = vmatpush.msra.mxu0 %v379
        %437 = vmatpush.msra.mxu0 %v375
        %438 = vmatpush.msra.mxu0 %v371
        %439 = vmatpush.msra.mxu0 %v367
        %440 = vmatmul.f32.gmra.mxu0 %v413
        %v441 = vpop.f32.mrf.mxu0
        %v442 = vadd.f32 %v394, %v441
        %443 = vmatmul.f32.gmra.mxu0 %v416
        %v444 = vpop.f32.mrf.mxu0
        %v445 = vadd.f32 %v399, %v444
        %446 = vmatmul.f32.gmra.mxu0 %v419
        %v447 = vpop.f32.mrf.mxu0
        %v448 = vadd.f32 %v404, %v447
        %449 = vmatmul.f32.gmra.mxu0 %v422
        %v450 = vpop.f32.mrf.mxu0
        %v451 = vadd.f32 %v409, %v450
        %452 = vdwg.mxu0
        %453 = vmatpush.msra.mxu0 0.0
        %454 = vmatpush.msra.mxu0 0.0
        %455 = vmatpush.msra.mxu0 0.0
        %456 = vmatpush.msra.mxu0 0.0
        %457 = vmatpush.msra.mxu0 0.0
        %458 = vmatpush.msra.mxu0 0.0
        %459 = vmatpush.msra.mxu0 0.0
        %460 = vmatpush.msra.mxu0 0.0
        %461 = vmatpush.msra.mxu0 0.0
        %462 = vmatpush.msra.mxu0 0.0
        %463 = vmatpush.msra.mxu0 0.0
        %464 = vmatpush.msra.mxu0 0.0
        %465 = vmatpush.msra.mxu0 %v380
        %466 = vmatpush.msra.mxu0 %v376
        %467 = vmatpush.msra.mxu0 %v372
        %468 = vmatpush.msra.mxu0 %v368
        %469 = vmatmul.f32.gmra.mxu0 %v413
        %v470 = vpop.f32.mrf.mxu0
        %v471 = vadd.f32 %v394, %v470
        %472 = vmatmul.f32.gmra.mxu0 %v416
        %v473 = vpop.f32.mrf.mxu0
        %v474 = vadd.f32 %v399, %v473
        %475 = vmatmul.f32.gmra.mxu0 %v419
        %v476 = vpop.f32.mrf.mxu0
        %v477 = vadd.f32 %v404, %v476
        %478 = vmatmul.f32.gmra.mxu0 %v422
        %v479 = vpop.f32.mrf.mxu0
        %v480 = vadd.f32 %v409, %v479
        %481 = vdwg.mxu0
        %482 = vmatpush.msra.mxu0 0.0
        %483 = vmatpush.msra.mxu0 0.0
        %484 = vmatpush.msra.mxu0 0.0
        %485 = vmatpush.msra.mxu0 0.0
        %486 = vmatpush.msra.mxu0 0.0
        %487 = vmatpush.msra.mxu0 0.0
        %488 = vmatpush.msra.mxu0 0.0
        %489 = vmatpush.msra.mxu0 0.0
        %490 = vmatpush.msra.mxu0 0.0
        %491 = vmatpush.msra.mxu0 0.0
        %492 = vmatpush.msra.mxu0 0.0
        %493 = vmatpush.msra.mxu0 0.0
        %494 = vmatpush.msra.mxu0 %v381
        %495 = vmatpush.msra.mxu0 %v377
        %496 = vmatpush.msra.mxu0 %v373
        %497 = vmatpush.msra.mxu0 %v369
        %498 = vmatmul.f32.gmra.mxu0 %v413
        %v499 = vpop.f32.mrf.mxu0
        %v500 = vadd.f32 %v394, %v499
        %501 = vmatmul.f32.gmra.mxu0 %v416
        %v502 = vpop.f32.mrf.mxu0
        %v503 = vadd.f32 %v399, %v502
        %504 = vmatmul.f32.gmra.mxu0 %v419
        %v505 = vpop.f32.mrf.mxu0
        %v506 = vadd.f32 %v404, %v505
        %507 = vmatmul.f32.gmra.mxu0 %v422
        %v508 = vpop.f32.mrf.mxu0
        %v509 = vadd.f32 %v409, %v508
        %510 = vdwg.mxu0
        %511 = vmatpush.msra.mxu0 0.0
        %512 = vmatpush.msra.mxu0 0.0
        %513 = vmatpush.msra.mxu0 0.0
        %514 = vmatpush.msra.mxu0 0.0
        %515 = vmatpush.msra.mxu0 0.0
        %516 = vmatpush.msra.mxu0 0.0
        %517 = vmatpush.msra.mxu0 0.0
        %518 = vmatpush.msra.mxu0 0.0
        %519 = vmatpush.msra.mxu0 0.0
        %520 = vmatpush.msra.mxu0 0.0
        %521 = vmatpush.msra.mxu0 0.0
        %522 = vmatpush.msra.mxu0 0.0
        %523 = vmatpush.msra.mxu0 %v382
        %524 = vmatpush.msra.mxu0 %v378
        %525 = vmatpush.msra.mxu0 %v374
        %526 = vmatpush.msra.mxu0 %v370
        %527 = vmatmul.f32.gmra.mxu0 %v413
        %v528 = vpop.f32.mrf.mxu0
        %v529 = vadd.f32 %v394, %v528
        %530 = vmatmul.f32.gmra.mxu0 %v416
        %v531 = vpop.f32.mrf.mxu0
        %v532 = vadd.f32 %v399, %v531
        %533 = vmatmul.f32.gmra.mxu0 %v419
        %v534 = vpop.f32.mrf.mxu0
        %v535 = vadd.f32 %v404, %v534
        %536 = vmatmul.f32.gmra.mxu0 %v422
        %v537 = vpop.f32.mrf.mxu0
        %v538 = vadd.f32 %v409, %v537
        %539 = vdwg.mxu0
        %v540 = vmax.f32 %v442, 0.0
        %v541 = vmax.f32 %v471, 0.0
        %v542 = vmax.f32 %v500, 0.0
        %v543 = vmax.f32 %v529, 0.0
        %v544 = vmax.f32 %v445, 0.0
        %v545 = vmax.f32 %v474, 0.0
        %v546 = vmax.f32 %v503, 0.0
        %v547 = vmax.f32 %v532, 0.0
        %v548 = vmax.f32 %v448, 0.0
        %v549 = vmax.f32 %v477, 0.0
        %v550 = vmax.f32 %v506, 0.0
        %v551 = vmax.f32 %v535, 0.0
        %v552 = vmax.f32 %v451, 0.0
        %v553 = vmax.f32 %v480, 0.0
        %v554 = vmax.f32 %v509, 0.0
        %v555 = vmax.f32 %v538, 0.0
        %v556 = vld [vmem:[%s5] sm:$0x3]
        %v557 = vld [vmem:[%s6] sm:$0x3]
        %559 = vset.pattern.permute.xlu0 0
        %560 = vperm.xlu0 %559, %v557
        %v561 = vpop.permute.xlu0 %560
        %v564 = vsel %vm411, %v556, 0
        %566 = vmatpush.msra.mxu0 0.0
        %567 = vmatpush.msra.mxu0 0.0
        %568 = vmatpush.msra.mxu0 0.0
        %569 = vmatpush.msra.mxu0 0.0
        %570 = vmatpush.msra.mxu0 0.0
        %571 = vmatpush.msra.mxu0 0.0
        %572 = vmatpush.msra.mxu0 0.0
        %573 = vmatpush.msra.mxu0 0.0
        %574 = vmatpush.msra.mxu0 0.0
        %575 = vmatpush.msra.mxu0 0.0
        %576 = vmatpush.msra.mxu0 0.0
        %577 = vmatpush.msra.mxu0 0.0
        %578 = vmatpush.msra.mxu0 %v552
        %579 = vmatpush.msra.mxu0 %v548
        %580 = vmatpush.msra.mxu0 %v544
        %581 = vmatpush.msra.mxu0 %v540
        %582 = vmatmul.f32.gmra.mxu0 %v564
        %v583 = vpop.f32.mrf.mxu0
        %v584 = vadd.f32 %v561, %v583
        %585 = vdwg.mxu0
        %586 = vmatpush.msra.mxu0 0.0
        %587 = vmatpush.msra.mxu0 0.0
        %588 = vmatpush.msra.mxu0 0.0
        %589 = vmatpush.msra.mxu0 0.0
        %590 = vmatpush.msra.mxu0 0.0
        %591 = vmatpush.msra.mxu0 0.0
        %592 = vmatpush.msra.mxu0 0.0
        %593 = vmatpush.msra.mxu0 0.0
        %594 = vmatpush.msra.mxu0 0.0
        %595 = vmatpush.msra.mxu0 0.0
        %596 = vmatpush.msra.mxu0 0.0
        %597 = vmatpush.msra.mxu0 0.0
        %598 = vmatpush.msra.mxu0 %v553
        %599 = vmatpush.msra.mxu0 %v549
        %600 = vmatpush.msra.mxu0 %v545
        %601 = vmatpush.msra.mxu0 %v541
        %602 = vmatmul.f32.gmra.mxu0 %v564
        %v603 = vpop.f32.mrf.mxu0
        %v604 = vadd.f32 %v561, %v603
        %605 = vdwg.mxu0
        %606 = vmatpush.msra.mxu0 0.0
        %607 = vmatpush.msra.mxu0 0.0
        %608 = vmatpush.msra.mxu0 0.0
        %609 = vmatpush.msra.mxu0 0.0
        %610 = vmatpush.msra.mxu0 0.0
        %611 = vmatpush.msra.mxu0 0.0
        %612 = vmatpush.msra.mxu0 0.0
        %613 = vmatpush.msra.mxu0 0.0
        %614 = vmatpush.msra.mxu0 0.0
        %615 = vmatpush.msra.mxu0 0.0
        %616 = vmatpush.msra.mxu0 0.0
        %617 = vmatpush.msra.mxu0 0.0
        %618 = vmatpush.msra.mxu0 %v554
        %619 = vmatpush.msra.mxu0 %v550
        %620 = vmatpush.msra.mxu0 %v546
        %621 = vmatpush.msra.mxu0 %v542
        %622 = vmatmul.f32.gmra.mxu0 %v564
        %v623 = vpop.f32.mrf.mxu0
        %v624 = vadd.f32 %v561, %v623
        %625 = vdwg.mxu0
        %626 = vmatpush.msra.mxu0 0.0
        %627 = vmatpush.msra.mxu0 0.0
        %628 = vmatpush.msra.mxu0 0.0
        %629 = vmatpush.msra.mxu0 0.0
        %630 = vmatpush.msra.mxu0 0.0
        %631 = vmatpush.msra.mxu0 0.0
        %632 = vmatpush.msra.mxu0 0.0
        %633 = vmatpush.msra.mxu0 0.0
        %634 = vmatpush.msra.mxu0 0.0
        %635 = vmatpush.msra.mxu0 0.0
        %636 = vmatpush.msra.mxu0 0.0
        %637 = vmatpush.msra.mxu0 0.0
        %638 = vmatpush.msra.mxu0 %v555
        %639 = vmatpush.msra.mxu0 %v551
        %640 = vmatpush.msra.mxu0 %v547
        %641 = vmatpush.msra.mxu0 %v543
        %642 = vmatmul.f32.gmra.mxu0 %v564
        %v643 = vpop.f32.mrf.mxu0
        %v644 = vadd.f32 %v561, %v643
        %645 = vdwg.mxu0
        %v646 = vlaneseq
        %v647 = vshrl.u32 %v646, 7
        %vm648 = vcmp.eq.s32.totalorder %v647, 0
        %vm649 = vcmp.gt.f32.partialorder %v584, 20.0
        %vm650 = vcmp.gt.f32.partialorder %v604, 20.0
        %vm651 = vcmp.gt.f32.partialorder %v624, 20.0
        %vm652 = vcmp.gt.f32.partialorder %v644, 20.0
        %v653 = vmin.f32 %v584, 20.0
        %v654 = vmin.f32 %v604, 20.0
        %v655 = vmin.f32 %v624, 20.0
        %v656 = vmin.f32 %v644, 20.0
        %v657 = vmul.f32 %v653, 1.442695
        %v658 = vpow.pop %v657
        %v659 = vmul.f32 %v654, 1.442695
        %v660 = vpow.pop %v659
        %v661 = vmul.f32 %v655, 1.442695
        %v662 = vpow.pop %v661
        %v663 = vmul.f32 %v656, 1.442695
        %v664 = vpow.pop %v663
        %v665 = vadd.f32 %v658, 1.0
        %v666 = vlog2.pop %v665
        %v667 = vmul.f32 %v666, 0.6931472
        %v668 = vmul.f32 -0.5, %v658
        %v669 = vadd.f32 %v668, 1.0
        %v670 = vmul.f32 %v669, %v658
        %v671 = vand.u32 2147483647, %v658
        %vm672 = vcmp.lt.f32.partialorder %v671, 0.0004427343
        %v673 = vsel %vm672, %v670, %v667
        %v674 = vadd.f32 %v660, 1.0
        %v675 = vlog2.pop %v674
        %v676 = vmul.f32 %v675, 0.6931472
        %v677 = vmul.f32 -0.5, %v660
        %v678 = vadd.f32 %v677, 1.0
        %v679 = vmul.f32 %v678, %v660
        %v680 = vand.u32 2147483647, %v660
        %vm681 = vcmp.lt.f32.partialorder %v680, 0.0004427343
        %v682 = vsel %vm681, %v679, %v676
        %v683 = vadd.f32 %v662, 1.0
        %v684 = vlog2.pop %v683
        %v685 = vmul.f32 %v684, 0.6931472
        %v686 = vmul.f32 -0.5, %v662
        %v687 = vadd.f32 %v686, 1.0
        %v688 = vmul.f32 %v687, %v662
        %v689 = vand.u32 2147483647, %v662
        %vm690 = vcmp.lt.f32.partialorder %v689, 0.0004427343
        %v691 = vsel %vm690, %v688, %v685
        %v692 = vadd.f32 %v664, 1.0
        %v693 = vlog2.pop %v692
        %v694 = vmul.f32 %v693, 0.6931472
        %v695 = vmul.f32 -0.5, %v664
        %v696 = vadd.f32 %v695, 1.0
        %v697 = vmul.f32 %v696, %v664
        %v698 = vand.u32 2147483647, %v664
        %vm699 = vcmp.lt.f32.partialorder %v698, 0.0004427343
        %v700 = vsel %vm699, %v697, %v694
        %v701 = vsel %vm649, %v584, %v673
        %v702 = vsel %vm650, %v604, %v682
        %v703 = vsel %vm651, %v624, %v691
        %v704 = vsel %vm652, %v644, %v700
        %v705 = vsel %vm648, %v584, %v701
        %v706 = vsel %vm648, %v604, %v702
        %v707 = vsel %vm648, %v624, %v703
        %v708 = vsel %vm648, %v644, %v704
        %v713 = vrot.slane %v706, 6
        %v714 = vrot.slane %v707, 4
        %v715 = vrot.slane %v708, 2
        %vm716 = vcmask 1041408
        %v717 = vsel %vm716, %v705, %v713
        %vm718 = vcmask 1045508
        %v719 = vsel %vm718, %v714, %v715
        %vm720 = vcmask 1043456
        %v721 = vsel %vm720, %v717, %v719
        %723 = vst [vmem:[%s270] sm:$0xff] %v721
        %s724 = sand.u32 %s181, 1
        %s725 = scalar_lea.sflag [#allocation3], %s724
        %s726 = sand.u32 %s181, 1
        %s727 = smul.addr %s726, 8
        %s728 = scalar_lea.vmem [#allocation2], %s727
        // Predicated region
        $region49: #{tpu_custom_call.1} parent=47 // pred_check
          %p729 = pneg %p191
        $region50: #{tpu_custom_call.1} parent=47 // pred_check_branch
          %731 = sbr.rel (%p729) target = $region52
        $region51: #{tpu_custom_call.1} parent=47 // pred_region
          %s732 = smul.u32 4, %s21
          %734 = vsyncadd %s725, 0
          %s735 = smul.addr %s732, 2
          %s736 = scalar_lea.hbm %s7, %s735
          %s738 = sshll.u32 %s728, 4
          %s739 = int_to_ptr.vmem [resolvable:$true] %s738
          %s740 = sshll.u32 %s736, 4
          %s741 = int_to_ptr.hbm [resolvable:$true] %s740
          %743 = dma.vmem_to_hbm [thread:$0]  %s739, 128, %s741, %s725
        $region52: #{tpu_custom_call.1} parent=47 // pred_fallthru
          _
      $region48: #{tpu_custom_call.1} parent=5 // pred_fallthru
        _
      %p744 = scmp.le.s32.totalorder 2, %s16
      // Predicated region
      $region53: #{tpu_custom_call.1} parent=5 // pred_check
        %p745 = pneg %p744
      $region54: #{tpu_custom_call.1} parent=5 // pred_check_branch
        %747 = sbr.rel (%p745) target = $region56
      $region55: #{tpu_custom_call.1} parent=5 // pred_region
        %s748 = ssub.s32 %s16, 2
        // Predicated region
        $region57: #{tpu_custom_call.1} parent=55 // pred_check
          %p749 = pneg %p197
        $region58: #{tpu_custom_call.1} parent=55 // pred_check_branch
          %751 = sbr.rel (%p749) target = $region60
        $region59: #{tpu_custom_call.1} parent=55 // pred_region
          %s752 = sand.u32 %s182, 1
          %s753 = scalar_lea.sflag [#allocation3], %s752
          %s754 = sand.u32 %s182, 1
          %s755 = smul.addr %s754, 8
          %s756 = scalar_lea.vmem [#allocation2], %s755
          %758 = dma.done %s753, 128
        $region60: #{tpu_custom_call.1} parent=55 // pred_fallthru
          _
      $region56: #{tpu_custom_call.1} parent=5 // pred_fallthru
        _
    $region6: #{tpu_custom_call.1} parent=1 // loop_footer
      %s20 = sadd.s32 1, %s16
    $region7: #{tpu_custom_call.1} parent=1 // loop_footer_branch
      %15 = sbr.rel target = $region3
    $region8: #{tpu_custom_call.1} parent=1 // loop_exit
      _
    %759 = vsyncpa [#allocation3], 1
    %s760 = scalar_lea.sflag [#allocation3], 1
    %761 = vsyncpa %s760, 1

</llo_original>
